<compile_context>
chip_gen: v6e
topology: v6e:2x2x1
jax: 0.10.0
libtpu: 0.0.40
codegen_flags: <defaults>
</compile_context>

<pallas_src>
import numpy as np

import jax
import jax.numpy as jnp
from jax import lax
from jax.experimental import pallas as pl
from jax.experimental.pallas import tpu as pltpu

N_BINS = 15


def _round_up(x, m):
    return ((x + m - 1) // m) * m


def _make_ece_kernel(n_valid, tile_n, tiles_per_core, has_padding):
    """Build the ECE partial-stats kernel (closed over static Python ints only)."""

    def kernel(logits_ref, labels_ref, stats_ref):
        core = pl.program_id(0)
        step = pl.program_id(1)

        # Output block (3, N_BINS) is resident across the inner (reduction) axis
        # for this core; zero it at the start of this core's sweep.
        @pl.when(step == 0)
        def _init():
            stats_ref[...] = jnp.zeros_like(stats_ref)

        logits = logits_ref[...]                     # [TN, C] f32
        labels = labels_ref[...]                     # [TN, 1] i32
        tn, c = logits.shape

        # ---- per-row phase (no [TN, C] softmax materialization) -----------
        row_max = jnp.max(logits, axis=1, keepdims=True)                 # [TN,1]
        sum_exp = jnp.sum(jnp.exp(logits - row_max), axis=1, keepdims=True)
        conf = 1.0 / sum_exp        # max softmax prob == exp(0)/sum_exp  [TN,1]

        # first-max argmax on raw logits (softmax is monotone per row ->
        # same index and same tie-breaking as torch.max / jnp.argmax)
        col_idx = lax.broadcasted_iota(jnp.int32, logits.shape, 1)
        pred = jnp.min(jnp.where(logits == row_max, col_idx, jnp.int32(c)),
                       axis=1, keepdims=True)                            # [TN,1]
        acc = (pred == labels).astype(jnp.float32)                       # [TN,1]

        # ---- bin assignment: conf in (b/15, (b+1)/15]  =>  b = ceil(15*conf)-1
        bin_idx = jnp.ceil(conf * jnp.float32(N_BINS)).astype(jnp.int32) - 1
        bin_idx = jnp.clip(bin_idx, 0, N_BINS - 1)                       # [TN,1]

        # padded rows (batch padding) contribute to no bin
        if has_padding:
            row0 = (core * tiles_per_core + step) * tile_n
            row_ids = row0 + lax.broadcasted_iota(jnp.int32, (tn, 1), 0)
            bin_idx = jnp.where(row_ids < n_valid, bin_idx, jnp.int32(N_BINS))

        bins = lax.broadcasted_iota(jnp.int32, (tn, N_BINS), 1)          # [TN,NB]
        in_bin = (bins == bin_idx).astype(jnp.float32)                   # [TN,NB]

        # ---- three dense axis-0 sums (plain VPU vreg adds) -----------------
        stats_ref[0:1, :] += jnp.sum(in_bin, axis=0, keepdims=True)         # count
        stats_ref[1:2, :] += jnp.sum(in_bin * conf, axis=0, keepdims=True)  # sum conf
        stats_ref[2:3, :] += jnp.sum(in_bin * acc, axis=0, keepdims=True)   # sum acc

    return kernel


def ece_loss(logits, labels, *, tile_n=None, n_cores=2):
    """logits: [N, C] float, labels: [N] int — returns shape (1,) float32."""
    n, c = logits.shape
    logits = logits.astype(jnp.float32)
    labels2d = labels.astype(jnp.int32).reshape(n, 1)

    # ---- byte-based tile sizing (sublane-aligned, clamped to the batch) ----
    n8 = _round_up(n, 8)
    if tile_n is None:
        target_block_bytes = 4 << 20                      # ~4 MiB logits block
        tn = _round_up(max(1, target_block_bytes // (4 * c)), 8)
    else:
        tn = _round_up(int(tile_n), 8)                    # enforce (8,128) rule
    tn = max(8, min(tn, n8))

    num_tiles = pl.cdiv(n, tn)
    ncores = n_cores if num_tiles >= n_cores else 1       # v7x megacore split
    tiles_per_core = pl.cdiv(num_tiles, ncores)
    total_tiles = ncores * tiles_per_core
    n_pad = total_tiles * tn

    if n_pad != n:
        logits = jnp.pad(logits, ((0, n_pad - n), (0, 0)))
        labels2d = jnp.pad(labels2d, ((0, n_pad - n), (0, 0)))

    kernel = _make_ece_kernel(n_valid=n, tile_n=tn,
                              tiles_per_core=tiles_per_core,
                              has_padding=(n_pad != n))

    # Explicit scoped-VMEM budget: double-buffered blocks + headroom for the
    # in-kernel [TN, C] temporaries; capped at 48 MiB (fits v7x's 64 MiB VMEM).
    block_bytes = tn * c * 4 + tn * 4
    vmem_limit = min(48 << 20, max(16 << 20, 8 * block_bytes + (2 << 20)))

    cost = pl.CostEstimate(
        flops=int(6 * n_pad * c + 8 * n_pad * N_BINS),
        transcendentals=int(n_pad * c),
        bytes_accessed=int(n_pad * c * 4 + n_pad * 4 + ncores * 3 * N_BINS * 4),
    )

    stats = pl.pallas_call(
        kernel,
        out_shape=jax.ShapeDtypeStruct((ncores, 3, N_BINS), jnp.float32),
        grid_spec=pltpu.PrefetchScalarGridSpec(
            num_scalar_prefetch=0,
            grid=(ncores, tiles_per_core),
            in_specs=[
                pl.BlockSpec((tn, c), lambda cc, i: (cc * tiles_per_core + i, 0)),
                pl.BlockSpec((tn, 1), lambda cc, i: (cc * tiles_per_core + i, 0)),
            ],
            # per-core partial stats block; kernel sees (3, N_BINS)
            out_specs=pl.BlockSpec((None, 3, N_BINS), lambda cc, i: (cc, 0, 0)),
        ),
        compiler_params=pltpu.CompilerParams(
            dimension_semantics=("parallel", "arbitrary"),
            vmem_limit_bytes=int(vmem_limit),
        ),
        cost_estimate=cost,
    )(logits, labels2d)

    # ---- trivial finalize in the wrapper (race-free across cores) ----------
    s = jnp.sum(stats, axis=0)                            # [3, N_BINS]
    cnt = s[0]
    has = cnt > 0.0
    safe = jnp.where(has, cnt, jnp.float32(1.0))
    gap = jnp.abs(s[1] / safe - s[2] / safe)
    ece = jnp.sum(jnp.where(has, gap * (cnt / jnp.float32(n)), jnp.float32(0.0)))
    return ece.reshape(1).astype(jnp.float32)


def _ece_reference(logits, labels, n_bins=N_BINS):
    softmaxes = jax.nn.softmax(logits, axis=1)
    conf = jnp.max(softmaxes, axis=1)
    pred = jnp.argmax(softmaxes, axis=1)
    acc = (pred == labels).astype(jnp.float32)
    ece = jnp.zeros((1,), jnp.float32)
    bounds = jnp.linspace(0.0, 1.0, n_bins + 1)
    for b in range(n_bins):
        in_bin = (conf > bounds[b]) & (conf <= bounds[b + 1])
        cnt = jnp.sum(in_bin.astype(jnp.float32))
        prop = cnt / conf.shape[0]
        safe = jnp.where(cnt > 0, cnt, 1.0)
        avg_c = jnp.sum(jnp.where(in_bin, conf, 0.0)) / safe
        avg_a = jnp.sum(jnp.where(in_bin, acc, 0.0)) / safe
        ece = ece + jnp.where(prop > 0, jnp.abs(avg_c - avg_a) * prop, 0.0)
    return ece


if __name__ == "__main__":
    key = jax.random.PRNGKey(0)
    k1, k2, k3, k4 = jax.random.split(key, 4)

    # Case 1: small, single tile, single core, no padding.
    batch, num_classes = 16, 8
    logits = jax.random.normal(k1, (batch, num_classes), dtype=jnp.float32) * 2.0
    labels = jax.random.randint(k2, (batch,), 0, num_classes, dtype=jnp.int32)

    result = ece_loss(logits, labels)
    jax.block_until_ready(result)
    ref = _ece_reference(logits, labels)
    assert result.shape == (1,)
    assert jnp.allclose(result, ref, atol=1e-5), (result, ref)

    # Case 2: multi-tile, two-core grid split, padded-row masking.
    batch2, num_classes2 = 20, 10
    logits2 = jax.random.normal(k3, (batch2, num_classes2), dtype=jnp.float32) * 3.0
    labels2 = jax.random.randint(k4, (batch2,), 0, num_classes2, dtype=jnp.int32)

    result2 = ece_loss(logits2, labels2, tile_n=8)   # tn=8, 4 tiles over 2 "cores"
    jax.block_until_ready(result2)
    ref2 = _ece_reference(logits2, labels2)
    assert jnp.allclose(result2, ref2, atol=1e-5), (result2, ref2)

    print("KERNEL_OK")
</pallas_src>

<mosaic_0001>
module attributes {stable_mosaic.version = 11 : i64} {
  func.func @kernel(%arg0: i32, %arg1: i32, %arg2: memref<16x8xf32, #tpu.memory_space<vmem>>, %arg3: memref<16x1xi32, #tpu.memory_space<vmem>>, %arg4: memref<1x3x15xf32, #tpu.memory_space<vmem>>) attributes {dimension_semantics = [#tpu.dimension_semantics<parallel>, #tpu.dimension_semantics<arbitrary>], iteration_bounds = array<i64: 1, 1>, scalar_prefetch = 0 : i64, scratch_operands = 0 : i64, tpu.core_type = #tpu.core_type<tc>, window_params = [{transform_indices = @transform_0, window_bounds = array<i64: 16, 8>}, {transform_indices = @transform_1, window_bounds = array<i64: 16, 1>}, {transform_indices = @transform_2, window_bounds = array<i64: 1, 3, 15>}]} {
    %c0_i32 = arith.constant 0 : i32
    %0 = arith.cmpi eq, %arg1, %c0_i32 : i32
    %1 = arith.extui %0 : i1 to i32
    %c0_i32_0 = arith.constant 0 : i32
    %2 = arith.cmpi ne, %1, %c0_i32_0 : i32
    scf.if %2 {
      %cst_28 = arith.constant 0.000000e+00 : f32
      %67 = vector.broadcast %cst_28 : f32 to vector<3x15xf32>
      %c0_29 = arith.constant 0 : index
      %c0_30 = arith.constant 0 : index
      %c0_31 = arith.constant 0 : index
      %68 = vector.load %arg4[%c0_29, %c0_30, %c0_31] : memref<1x3x15xf32, #tpu.memory_space<vmem>>, vector<1x3x15xf32>
      %69 = vector.shape_cast %68 : vector<1x3x15xf32> to vector<3x15xf32>
      %70 = vector.shape_cast %67 : vector<3x15xf32> to vector<1x3x15xf32>
      tpu.vector_store %arg4[%c0_29, %c0_30, %c0_31], %70 {strides = array<i32>} : memref<1x3x15xf32, #tpu.memory_space<vmem>>, vector<1x3x15xf32>,
    } else {
    }
    %c0 = arith.constant 0 : index
    %c0_1 = arith.constant 0 : index
    %3 = vector.load %arg2[%c0, %c0_1] : memref<16x8xf32, #tpu.memory_space<vmem>>, vector<16x8xf32>
    %c0_2 = arith.constant 0 : index
    %c0_3 = arith.constant 0 : index
    %4 = vector.load %arg3[%c0_2, %c0_3] : memref<16x1xi32, #tpu.memory_space<vmem>>, vector<16x1xi32>
    %cst = arith.constant dense<0xFF800000> : vector<16xf32>
    %5 = vector.multi_reduction <maximumf>, %3, %cst [1] : vector<16x8xf32> to vector<16xf32>
    %6 = vector.shape_cast %5 : vector<16xf32> to vector<16x1xf32>
    %7 = vector.broadcast %6 : vector<16x1xf32> to vector<16x8xf32>
    %8 = arith.subf %3, %7 : vector<16x8xf32>
    %9 = math.exp %8 : vector<16x8xf32>
    %cst_4 = arith.constant dense<0.000000e+00> : vector<16xf32>
    %10 = vector.multi_reduction <add>, %9, %cst_4 [1] : vector<16x8xf32> to vector<16xf32>
    %11 = vector.shape_cast %10 : vector<16xf32> to vector<16x1xf32>
    %cst_5 = arith.constant 1.000000e+00 : f32
    %12 = vector.broadcast %cst_5 : f32 to vector<16x1xf32>
    %13 = arith.divf %12, %11 : vector<16x1xf32>
    %14 = tpu.iota {dimensions = array<i32: 1>} : vector<16x8xi32>
    %15 = vector.broadcast %6 : vector<16x1xf32> to vector<16x8xf32>
    %16 = arith.cmpf oeq, %3, %15 : vector<16x8xf32>
    %c8_i32 = arith.constant 8 : i32
    %17 = vector.broadcast %c8_i32 : i32 to vector<16x8xi32>
    %18 = arith.select %16, %14, %17 : vector<16x8xi1>, vector<16x8xi32>
    %cst_6 = arith.constant dense<2147483647> : vector<16xi32>
    %19 = vector.multi_reduction <minsi>, %18, %cst_6 [1] : vector<16x8xi32> to vector<16xi32>
    %20 = vector.shape_cast %19 : vector<16xi32> to vector<16x1xi32>
    %21 = arith.cmpi eq, %20, %4 : vector<16x1xi32>
    %22 = arith.extui %21 : vector<16x1xi1> to vector<16x1xi32>
    %23 = arith.sitofp %22 : vector<16x1xi32> to vector<16x1xf32>
    %cst_7 = arith.constant 1.500000e+01 : f32
    %24 = vector.broadcast %cst_7 : f32 to vector<16x1xf32>
    %25 = arith.mulf %13, %24 : vector<16x1xf32>
    %26 = math.ceil %25 : vector<16x1xf32>
    %27 = arith.fptosi %26 : vector<16x1xf32> to vector<16x1xi32>
    %c1_i32 = arith.constant 1 : i32
    %28 = vector.broadcast %c1_i32 : i32 to vector<16x1xi32>
    %29 = arith.subi %27, %28 : vector<16x1xi32>
    %c0_i32_8 = arith.constant 0 : i32
    %c14_i32 = arith.constant 14 : i32
    %30 = vector.broadcast %c0_i32_8 : i32 to vector<16x1xi32>
    %31 = arith.maxsi %30, %29 : vector<16x1xi32>
    %32 = vector.broadcast %c14_i32 : i32 to vector<16x1xi32>
    %33 = arith.minsi %32, %31 : vector<16x1xi32>
    %34 = tpu.iota {dimensions = array<i32: 1>} : vector<16x15xi32>
    %35 = vector.broadcast %33 : vector<16x1xi32> to vector<16x15xi32>
    %36 = arith.cmpi eq, %34, %35 : vector<16x15xi32>
    %37 = arith.extui %36 : vector<16x15xi1> to vector<16x15xi32>
    %38 = arith.sitofp %37 : vector<16x15xi32> to vector<16x15xf32>
    %c0_9 = arith.constant 0 : index
    %c0_10 = arith.constant 0 : index
    %c0_11 = arith.constant 0 : index
    %39 = vector.load %arg4[%c0_9, %c0_10, %c0_11] : memref<1x3x15xf32, #tpu.memory_space<vmem>>, vector<1x1x15xf32>
    %40 = vector.shape_cast %39 : vector<1x1x15xf32> to vector<1x15xf32>
    %cst_12 = arith.constant dense<0.000000e+00> : vector<15xf32>
    %41 = vector.multi_reduction <add>, %38, %cst_12 [0] : vector<16x15xf32> to vector<15xf32>
    %42 = vector.shape_cast %41 : vector<15xf32> to vector<1x15xf32>
    %43 = arith.addf %40, %42 : vector<1x15xf32>
    %c0_13 = arith.constant 0 : index
    %c0_14 = arith.constant 0 : index
    %c0_15 = arith.constant 0 : index
    %44 = vector.load %arg4[%c0_13, %c0_14, %c0_15] : memref<1x3x15xf32, #tpu.memory_space<vmem>>, vector<1x1x15xf32>
    %45 = vector.shape_cast %44 : vector<1x1x15xf32> to vector<1x15xf32>
    %46 = vector.shape_cast %43 : vector<1x15xf32> to vector<1x1x15xf32>
    tpu.vector_store %arg4[%c0_13, %c0_14, %c0_15], %46 {strides = array<i32>} : memref<1x3x15xf32, #tpu.memory_space<vmem>>, vector<1x1x15xf32>,
    %c0_16 = arith.constant 0 : index
    %c1 = arith.constant 1 : index
    %c0_17 = arith.constant 0 : index
    %47 = vector.load %arg4[%c0_16, %c1, %c0_17] : memref<1x3x15xf32, #tpu.memory_space<vmem>>, vector<1x1x15xf32>
    %48 = vector.shape_cast %47 : vector<1x1x15xf32> to vector<1x15xf32>
    %49 = vector.broadcast %13 : vector<16x1xf32> to vector<16x15xf32>
    %50 = arith.mulf %38, %49 : vector<16x15xf32>
    %cst_18 = arith.constant dense<0.000000e+00> : vector<15xf32>
    %51 = vector.multi_reduction <add>, %50, %cst_18 [0] : vector<16x15xf32> to vector<15xf32>
    %52 = vector.shape_cast %51 : vector<15xf32> to vector<1x15xf32>
    %53 = arith.addf %48, %52 : vector<1x15xf32>
    %c0_19 = arith.constant 0 : index
    %c1_20 = arith.constant 1 : index
    %c0_21 = arith.constant 0 : index
    %54 = vector.load %arg4[%c0_19, %c1_20, %c0_21] : memref<1x3x15xf32, #tpu.memory_space<vmem>>, vector<1x1x15xf32>
    %55 = vector.shape_cast %54 : vector<1x1x15xf32> to vector<1x15xf32>
    %56 = vector.shape_cast %53 : vector<1x15xf32> to vector<1x1x15xf32>
    tpu.vector_store %arg4[%c0_19, %c1_20, %c0_21], %56 {strides = array<i32>} : memref<1x3x15xf32, #tpu.memory_space<vmem>>, vector<1x1x15xf32>,
    %c0_22 = arith.constant 0 : index
    %c2 = arith.constant 2 : index
    %c0_23 = arith.constant 0 : index
    %57 = vector.load %arg4[%c0_22, %c2, %c0_23] : memref<1x3x15xf32, #tpu.memory_space<vmem>>, vector<1x1x15xf32>
    %58 = vector.shape_cast %57 : vector<1x1x15xf32> to vector<1x15xf32>
    %59 = vector.broadcast %23 : vector<16x1xf32> to vector<16x15xf32>
    %60 = arith.mulf %38, %59 : vector<16x15xf32>
    %cst_24 = arith.constant dense<0.000000e+00> : vector<15xf32>
    %61 = vector.multi_reduction <add>, %60, %cst_24 [0] : vector<16x15xf32> to vector<15xf32>
    %62 = vector.shape_cast %61 : vector<15xf32> to vector<1x15xf32>
    %63 = arith.addf %58, %62 : vector<1x15xf32>
    %c0_25 = arith.constant 0 : index
    %c2_26 = arith.constant 2 : index
    %c0_27 = arith.constant 0 : index
    %64 = vector.load %arg4[%c0_25, %c2_26, %c0_27] : memref<1x3x15xf32, #tpu.memory_space<vmem>>, vector<1x1x15xf32>
    %65 = vector.shape_cast %64 : vector<1x1x15xf32> to vector<1x15xf32>
    %66 = vector.shape_cast %63 : vector<1x15xf32> to vector<1x1x15xf32>
    tpu.vector_store %arg4[%c0_25, %c2_26, %c0_27], %66 {strides = array<i32>} : memref<1x3x15xf32, #tpu.memory_space<vmem>>, vector<1x1x15xf32>,
    return
  }
  func.func @transform_0(%arg0: i32, %arg1: i32) -> (i32, i32) {
    %c1_i32 = arith.constant 1 : i32
    %0 = arith.muli %arg0, %c1_i32 : i32
    %1 = arith.addi %0, %arg1 : i32
    %c0_i32 = arith.constant 0 : i32
    %c0_i32_0 = arith.constant 0 : i32
    return %1, %c0_i32 : i32, i32
  }
  func.func @transform_1(%arg0: i32, %arg1: i32) -> (i32, i32) {
    %c1_i32 = arith.constant 1 : i32
    %0 = arith.muli %arg0, %c1_i32 : i32
    %1 = arith.addi %0, %arg1 : i32
    %c0_i32 = arith.constant 0 : i32
    %c0_i32_0 = arith.constant 0 : i32
    return %1, %c0_i32 : i32, i32
  }
  func.func @transform_2(%arg0: i32, %arg1: i32) -> (i32, i32, i32) {
    %c0_i32 = arith.constant 0 : i32
    %c0_i32_0 = arith.constant 0 : i32
    %c0_i32_1 = arith.constant 0 : i32
    return %arg0, %c0_i32, %c0_i32_0 : i32, i32, i32
  }
}

</mosaic_0001>

<llo_original>
// kernel: tpu_custom_call.1
$region0: #{tpu_custom_call.1}
  #allocation0 [shape = 'u32[]', space=smem, size = 0x4, offset = 0x4, fixed_abs, tag = 'smem constant byte address 0x4 - core index']
  #allocation1 [shape = 'u32[144,128]{1,0:T(1,128)}', space=vmem, size = 0x12000, scoped, tag = 'internal scratch']
  %s0 = inlined_call_operand.vmem [shape: f32[16,8], index: 0, kind: input, shape index: {}]
  %s1 = inlined_call_operand.vmem [shape: s32[16,1], index: 1, kind: input, shape index: {}]
  %s2 = inlined_call_operand.vmem [shape: f32[1,3,15], index: 2, kind: output, shape index: {}]
  %s3 = sld [smem:[#allocation0]]
  $region22: #{tpu_custom_call.1} parent=0
    _
  %s5 = ssub.s32 1, %s3
  %s6 = scalar_select 0, %s5, %s3
  // Predicated region
  $region2: #{tpu_custom_call.1} parent=0 // pred_check
    _
  $region3: #{tpu_custom_call.1} parent=0 // pred_check_branch
    %8 = sbr.rel (0) target = $region5
  $region4: #{tpu_custom_call.1} parent=0 // pred_region
    %s9 = sadd.s32 0, 0
    %s10 = smul.u32 2, %s9
    %p11 = scmp.lt.s32.totalorder %s10, 1
    %s12 = scalar_select %p11, %s10, 1
    %s13 = smul.addr %s12, 8
    %s14 = scalar_lea.vmem %s0, %s13
    %s15 = sadd.s32 0, 0
    %s16 = smul.u32 2, %s15
  $region5: #{tpu_custom_call.1} parent=0 // pred_fallthru
    _
  // Predicated region
  $region6: #{tpu_custom_call.1} parent=0 // pred_check
    _
  $region7: #{tpu_custom_call.1} parent=0 // pred_check_branch
    %18 = sbr.rel (0) target = $region9
  $region8: #{tpu_custom_call.1} parent=0 // pred_region
    %s19 = sadd.s32 0, 0
    %s20 = smul.u32 2, %s19
    %p21 = scmp.lt.s32.totalorder %s20, 1
    %s22 = scalar_select %p21, %s20, 1
    %s23 = smul.addr %s22, 8
    %s24 = scalar_lea.vmem %s1, %s23
    %s25 = sadd.s32 0, 0
    %s26 = smul.u32 2, %s25
  $region9: #{tpu_custom_call.1} parent=0 // pred_fallthru
    _
  %s27 = sadd.s32 0, 0
  %s28 = smul.u32 2, %s27
  %p29 = scmp.lt.s32.totalorder %s28, 1
  %s30 = scalar_select %p29, %s28, 1
  %s31 = smul.addr %s30, 8
  %s32 = scalar_lea.vmem %s0, %s31
  %s33 = sadd.s32 0, 0
  %s34 = smul.u32 2, %s33
  %p35 = scmp.lt.s32.totalorder %s34, 1
  %s36 = scalar_select %p35, %s34, 1
  %s37 = smul.addr %s36, 8
  %s38 = scalar_lea.vmem %s1, %s37
  %s39 = sadd.s32 0, 0
  %s40 = smul.u32 2, %s39
  %p41 = scmp.lt.s32.totalorder %s40, 1
  %s42 = scalar_select %p41, %s40, 1
  %s43 = smul.addr %s42, 8
  %s44 = scalar_lea.vmem %s0, %s43
  %s45 = sadd.s32 0, 0
  %s46 = smul.u32 2, %s45
  %s47 = sadd.s32 0, 0
  %s48 = smul.u32 2, %s47
  %p49 = scmp.lt.s32.totalorder %s48, 1
  %s50 = scalar_select %p49, %s48, 1
  %s51 = smul.addr %s50, 8
  %s52 = scalar_lea.vmem %s1, %s51
  %s53 = sadd.s32 0, 0
  %s54 = smul.u32 2, %s53
  %p55 = scmp.eq.s32.totalorder 0, 0
  // Predicated region
  $region10: #{tpu_custom_call.1} parent=0 // pred_check
    %p56 = pneg %p55
  $region11: #{tpu_custom_call.1} parent=0 // pred_check_branch
    %58 = sbr.rel (%p56) target = $region13
  $region12: #{tpu_custom_call.1} parent=0 // pred_region
    %vm59 = vcmask 116736
    %60 = vst.msk [vmem:[%s2] sm:$0x7] %vm59, 0.0
  $region13: #{tpu_custom_call.1} parent=0 // pred_fallthru
    _
  %v61 = vld [vmem:[%s44] sm:$0xff]
  %v62 = vld [vmem:[%s44 + $0x8] sm:$0xff]
  %v63 = vld [vmem:[%s52] sm:$0xff]
  %v64 = vld [vmem:[%s52 + $0x8] sm:$0xff]
  %vm65 = vcmask 64512
  %v66 = vsel %vm65, %v61, -inf
  %67 = vmax.xlane.f32.xlu0 %v66
  %v68 = vpop.xlane.xlu0 %67
  %v69 = vsel %vm65, %v62, -inf
  %70 = vmax.xlane.f32.xlu0 %v69
  %v71 = vpop.xlane.xlu0 %70
  %v72 = vsub.f32 %v61, %v68
  %v73 = vsub.f32 %v62, %v71
  %v74 = vmul.f32 %v72, 1.442695
  %v75 = vpow.pop %v74
  %v76 = vmul.f32 %v73, 1.442695
  %v77 = vpow.pop %v76
  %v78 = vsel %vm65, %v75, 0.0
  %79 = vadd.xlane.f32.xlu0 %v78
  %v80 = vpop.xlane.xlu0 %79
  %v81 = vsel %vm65, %v77, 0.0
  %82 = vadd.xlane.f32.xlu0 %v81
  %v83 = vpop.xlane.xlu0 %82
  %v84 = vrcp.pop %v80
  %v85 = vmul.f32 1.0, %v84
  %v86 = vrcp.pop %v83
  %v87 = vmul.f32 1.0, %v86
  %v88 = vlaneseq
  %v89 = vand.u32 %v88, 127
  %vm90 = vcmp.eq.f32.partialorder %v61, %v68
  %vm91 = vcmp.eq.f32.partialorder %v62, %v71
  %v92 = vsel %vm90, %v89, 8
  %v93 = vsel %vm91, %v89, 8
  %v94 = vsel %vm65, %v92, 2147483647
  %v95 = vand.u32 %v94, 65535
  %v96 = vshra.s32 %v94, 16
  %v97 = vcvt.s32.f32 %v95
  %v98 = vcvt.s32.f32 %v96
  %99 = vmin.xlane.f32.xlu0 %v98
  %v100 = vpop.xlane.xlu0 %99
  %vm101 = vcmp.eq.f32.partialorder %v98, %v100
  %v102 = vsel %vm101, %v97, inf
  %103 = vmin.xlane.f32.xlu0 %v102
  %v104 = vpop.xlane.xlu0 %103
  %v105 = vcvt.f32.s32 %v104
  %v106 = vcvt.f32.s32 %v100
  %v107 = vshll.u32 %v106, 16
  %v108 = vadd.s32 %v107, %v105
  %v109 = vsel %vm65, %v93, 2147483647
  %v110 = vand.u32 %v109, 65535
  %v111 = vshra.s32 %v109, 16
  %v112 = vcvt.s32.f32 %v110
  %v113 = vcvt.s32.f32 %v111
  %114 = vmin.xlane.f32.xlu0 %v113
  %v115 = vpop.xlane.xlu0 %114
  %vm116 = vcmp.eq.f32.partialorder %v113, %v115
  %v117 = vsel %vm116, %v112, inf
  %118 = vmin.xlane.f32.xlu0 %v117
  %v119 = vpop.xlane.xlu0 %118
  %v120 = vcvt.f32.s32 %v119
  %v121 = vcvt.f32.s32 %v115
  %v122 = vshll.u32 %v121, 16
  %v123 = vadd.s32 %v122, %v120
  %vm124 = vcmp.eq.s32.totalorder %v108, %v63
  %vm125 = vcmp.eq.s32.totalorder %v123, %v64
  %v126 = vsel %vm124, 1, 0
  %v127 = vsel %vm125, 1, 0
  %v128 = vcvt.s32.f32 %v126
  %v129 = vcvt.s32.f32 %v127
  %v130 = vmul.f32 %v85, 15.0
  %v131 = vmul.f32 %v87, 15.0
  %v132 = vceil.f32 %v130
  %v133 = vceil.f32 %v131
  %v134 = vcvt.f32.s32.to.zero.pseudo %v132
  %v135 = vcvt.f32.s32.to.zero.pseudo %v133
  %v136 = vsub.s32 %v134, 1
  %v137 = vsub.s32 %v135, 1
  %vm138 = vcmp.gt.s32.totalorder %v136, 0
  %v139 = vsel %vm138, %v136, 0
  %vm140 = vcmp.gt.s32.totalorder %v137, 0
  %v141 = vsel %vm140, %v137, 0
  %vm142 = vcmp.lt.s32.totalorder %v139, 14
  %v143 = vsel %vm142, %v139, 14
  %vm144 = vcmp.lt.s32.totalorder %v141, 14
  %v145 = vsel %vm144, %v141, 14
  %vm146 = vcmp.eq.s32.totalorder %v89, %v143
  %vm147 = vcmp.eq.s32.totalorder %v89, %v145
  %v148 = vsel %vm146, 1, 0
  %v149 = vsel %vm147, 1, 0
  %v150 = vcvt.s32.f32 %v148
  %v151 = vcvt.s32.f32 %v149
  %v152 = vld [vmem:[%s2] sm:$0x1]
  %vm153 = vcmask 121856
  %v154 = vsel %vm153, %v150, 0.0
  %v155 = vsel %vm153, %v151, 0.0
  %v156 = vadd.f32 %v154, %v155
  %v157 = vrot.slane %v156, 4
  %v158 = vadd.f32 %v156, %v157
  %v159 = vrot.slane %v158, 2
  %v160 = vadd.f32 %v158, %v159
  %v161 = vrot.slane %v160, 1
  %v162 = vadd.f32 %v160, %v161
  %v163 = vadd.f32 %v152, %v162
  %vm164 = vcmask 114688
  %165 = vst.msk [vmem:[%s2] sm:$0x1] %vm164, %v163
  %v166 = vld [vmem:[%s2 + $0x1] sm:$0x1]
  %v167 = vmul.f32 %v150, %v85
  %v168 = vmul.f32 %v151, %v87
  %v169 = vsel %vm153, %v167, 0.0
  %v170 = vsel %vm153, %v168, 0.0
  %v171 = vadd.f32 %v169, %v170
  %v172 = vrot.slane %v171, 4
  %v173 = vadd.f32 %v171, %v172
  %v174 = vrot.slane %v173, 2
  %v175 = vadd.f32 %v173, %v174
  %v176 = vrot.slane %v175, 1
  %v177 = vadd.f32 %v175, %v176
  %v178 = vadd.f32 %v166, %v177
  %179 = vst.msk [vmem:[%s2 + $0x1] sm:$0x1] %vm164, %v178
  %v180 = vld [vmem:[%s2 + $0x2] sm:$0x1]
  %182 = vset.pattern.permute.xlu0 0
  %183 = vperm.xlu0 %182, %v128
  %v184 = vpop.permute.xlu0 %183
  %187 = vset.pattern.permute.xlu0 0
  %188 = vperm.xlu0 %187, %v129
  %v189 = vpop.permute.xlu0 %188
  %v191 = vmul.f32 %v150, %v184
  %v192 = vmul.f32 %v151, %v189
  %v193 = vsel %vm153, %v191, 0.0
  %v194 = vsel %vm153, %v192, 0.0
  %v195 = vadd.f32 %v193, %v194
  %v196 = vrot.slane %v195, 4
  %v197 = vadd.f32 %v195, %v196
  %v198 = vrot.slane %v197, 2
  %v199 = vadd.f32 %v197, %v198
  %v200 = vrot.slane %v199, 1
  %v201 = vadd.f32 %v199, %v200
  %v202 = vadd.f32 %v180, %v201
  %203 = vst.msk [vmem:[%s2 + $0x2] sm:$0x1] %vm164, %v202
  // Predicated region
  $region14: #{tpu_custom_call.1} parent=0 // pred_check
    _
  $region15: #{tpu_custom_call.1} parent=0 // pred_check_branch
    %205 = sbr.rel (0) target = $region17
  $region16: #{tpu_custom_call.1} parent=0 // pred_region
    _
  $region17: #{tpu_custom_call.1} parent=0 // pred_fallthru
    _
  // Predicated region
  $region18: #{tpu_custom_call.1} parent=0 // pred_check
    _
  $region19: #{tpu_custom_call.1} parent=0 // pred_check_branch
    %207 = sbr.rel (0) target = $region21
  $region20: #{tpu_custom_call.1} parent=0 // pred_region
    _
  $region21: #{tpu_custom_call.1} parent=0 // pred_fallthru
    _

</llo_original>
